<compile_context>
chip_gen: v7x
topology: tpu7x:2x2x1
jax: 0.10.0
libtpu: 0.0.40
codegen_flags: <defaults>
</compile_context>

<pallas_src>
import numpy as np
import jax
import jax.numpy as jnp
from jax.experimental import pallas as pl
from jax.experimental.pallas import tpu as pltpu

WIN_SIZE = 60                    # max-pooling window (frames)
OFFSET_D = 40                    # offset_d (frames)
TRUNC = 21                       # truncated gaussian length (frames)
SIGMA = 9.0                      # gaussian sigma (frames)
SAME_LEFT_PAD = (WIN_SIZE - 1) // 2   # torch conv1d padding='same': left=29, right=30


def _full_filter(win=WIN_SIZE, trunc=TRUNC, sigma=SIGMA):
    """Length-`win` filter: truncated Gaussian centered in a zero window."""
    half = trunc // 2
    x = np.arange(-half, half + 1, dtype=np.float64)
    g = np.exp(-0.5 * (x / sigma) ** 2)
    g = g / g.sum()
    f = np.zeros(win, dtype=np.float64)
    c = win // 2
    f[c - half:c + half + 1] = g
    return f


def _band_matrix(T, win=WIN_SIZE, trunc=TRUNC, sigma=SIGMA):
    """(T, twp) matrix M so that (w @ M)[t'] == conv1d(w, filt, padding='same')[t']
    for the extended track t' in [0, T + win); columns beyond T+win are zero."""
    f = _full_filter(win, trunc, sigma)
    left = (win - 1) // 2
    tw = T + win
    twp = ((tw + 127) // 128) * 128           # lane-pad the smoothed track
    band = np.zeros((T, twp), dtype=np.float32)
    for j in range(win):
        if f[j] == 0.0:
            continue
        for u in range(T):
            t = u - j + left                  # smooth[t] += f[j] * w[t + j - left]
            if 0 <= t < tw:
                band[u, t] = f[j]
    return band, twp


def _smp_kernel(meta_ref, oh_ref, band_ref, x_ref, out_ref):
    """One batch block.  x_ref: (bblk, C, T) -- time on the 128-lane axis."""
    bblk, C, T = x_ref.shape
    twp = band_ref.shape[1]

    meta = meta_ref[...]                             # (bblk, 8) int32
    length = meta[:, 0:1]
    start = meta[:, 1:2]
    end = meta[:, 2:3]
    pool_end = meta[:, 3:4]                          # start + maxwin
    validf = meta[:, 4:5].astype(jnp.float32)        # 1 if tgt != -1
    wgt = meta[:, 5:6].astype(jnp.float32)           # 0 for batch padding rows

    onehot = oh_ref[...]                             # (bblk, C, 1) f32 target one-hot

    # ---- element-wise negative loss over the (bblk, C, T) slab ---------------
    # cast folded into the clamp; no separate live f32 slab.
    # TODO(synk): use -log1p(-x) here once log1p lowering is guaranteed on Mosaic.
    x_clamp = jnp.clip(x_ref[...].astype(jnp.float32), 1e-8, 1.0)   # (bblk, C, T)
    negl_c = jnp.sum(-jnp.log(1.0 - x_clamp), axis=1)               # (bblk, T)

    t_row = jax.lax.broadcasted_iota(jnp.int32, (1, T), 1)
    inside_len = t_row < length                                     # (bblk, T)
    # positions t >= length are masked AFTER the class reduce (raw values never
    # leak: jnp.where selects, it does not multiply).
    neg_all = jnp.sum(jnp.where(inside_len, negl_c, 0.0),
                      axis=1, keepdims=True)                        # (bblk, 1)

    # ---- target-class track (the single remaining one-hot slab pass) ---------
    prob = jnp.sum(x_clamp * onehot, axis=1)                        # (bblk, T)
    # one-hot selects exactly one class, so this equals the slab value at tgt:
    negl_t = -jnp.log(1.0 - prob)                                   # (bblk, T)

    in_window = jnp.logical_and(t_row >= start, t_row < end)        # (bblk, T)
    tgt_sub = jnp.sum(jnp.where(in_window, negl_t, 0.0),
                      axis=1, keepdims=True) * validf               # (bblk, 1)

    # ---- smoothed max pooling: banded Gaussian conv on the idle MXU ----------
    w = jnp.where(in_window, prob, 0.0)                             # (bblk, T)
    smooth = jnp.dot(w, band_ref[...],
                     preferred_element_type=jnp.float32)            # (bblk, twp)

    tw_row = jax.lax.broadcasted_iota(jnp.int32, (1, twp), 1)
    in_pool = jnp.logical_and(tw_row >= start, tw_row < pool_end)
    max_sm = jnp.max(jnp.where(in_pool, smooth, 0.0),
                     axis=1, keepdims=True)                         # (bblk, 1)
    pos = -jnp.log(jnp.clip(max_sm, 1e-8, 1.0)) * validf

    out_ref[...] = (neg_all - tgt_sub + pos) * wgt


def _pick_blocking(B, row_bytes):
    """bblk multiple of 8, ~2 MiB X tiles, >= 2 grid steps (v7x megacore)."""
    bblk = max(8, min(512, ((2 * 1024 * 1024) // max(row_bytes, 1)) // 8 * 8))
    min_steps = 2
    cap = max(8, ((-(-B // min_steps)) + 7) // 8 * 8)
    bblk = min(bblk, cap)
    steps = max(min_steps, -(-B // bblk))
    return bblk, steps * bblk


def _vmem_limit_bytes():
    """Generation-aware VMEM cap: ~85% of physical, never above 112 MiB."""
    cap = None
    try:
        cap = getattr(pltpu.get_tpu_info(), "vmem_capacity_bytes", None)
    except Exception:
        cap = None
    if not cap:
        cap = 64 * 1024 * 1024          # conservative (v7x per-TC physical)
    return int(min(int(cap * 0.85), 112 * 1024 * 1024))


def decoder_smp_loss(X, lengths, tgt, w_end, win_size=WIN_SIZE, offset_d=OFFSET_D):
    """X: (B, T, C) float32/bfloat16; lengths/tgt/w_end: (B,) int.  Scalar loss."""
    B, T, C = X.shape
    lengths = lengths.astype(jnp.int32).reshape(B, 1)
    tgt = tgt.astype(jnp.int32).reshape(B, 1)
    w_end = w_end.astype(jnp.int32).reshape(B, 1)

    valid = tgt != -1
    starts = jnp.maximum(0, w_end + offset_d - win_size)
    ends = jnp.minimum(starts + win_size, lengths)
    starts = jnp.where(valid, starts, 0).astype(jnp.int32)
    ends = jnp.where(valid, ends, 0).astype(jnp.int32)
    maxwin = jnp.maximum(jnp.max(jnp.where(valid, ends - starts, 0)), 1).astype(jnp.int32)
    pool_ends = (starts + maxwin).astype(jnp.int32)       # shared max window size
    validi = valid.astype(jnp.int32)
    weighti = jnp.ones((B, 1), jnp.int32)                 # 0 for batch padding rows

    # one packed metadata operand instead of six (one DMA / double-buffer)
    meta = jnp.concatenate(
        [lengths, starts, ends, pool_ends, validi, weighti,
         jnp.zeros((B, 2), jnp.int32)], axis=1)           # (B, 8) int32

    onehot = (jnp.arange(C, dtype=jnp.int32)[None, :, None] ==
              tgt.reshape(B, 1, 1)).astype(jnp.float32)   # (B, C, 1)

    # lane-dense layout for the slab pass: time on the 128-lane axis.
    # TODO(synk): keep the natural (B, T, C) layout (skip this transpose) when C >= 128.
    Xt = jnp.transpose(X, (0, 2, 1))                      # (B, C, T)

    row_bytes = T * C * jnp.dtype(X.dtype).itemsize
    bblk, bpad = _pick_blocking(B, row_bytes)
    if bpad != B:
        p = bpad - B
        meta = jnp.pad(meta, ((0, p), (0, 0)))
        onehot = jnp.pad(onehot, ((0, p), (0, 0), (0, 0)))
        Xt = jnp.pad(Xt, ((0, p), (0, 0), (0, 0)))

    band_np, twp = _band_matrix(T, win_size)
    band = jnp.asarray(band_np)                           # (T, twp) f32, fetched once
    # TODO(synk): for very large T, smooth only [start, start+maxwin+TRUNC) instead
    # of the full T+win track (the banded matmul is O(T^2)).

    grid_spec = pltpu.PrefetchScalarGridSpec(
        num_scalar_prefetch=0,
        grid=(bpad // bblk,),
        in_specs=[
            pl.BlockSpec((bblk, 8), lambda i: (i, 0)),          # packed metadata
            pl.BlockSpec((bblk, C, 1), lambda i: (i, 0, 0)),    # target one-hot
            pl.BlockSpec((T, twp), lambda i: (0, 0)),           # banded Gaussian (const)
            pl.BlockSpec((bblk, C, T), lambda i: (i, 0, 0)),    # X, lane-dense in T
        ],
        out_specs=pl.BlockSpec((bblk, 1), lambda i: (i, 0)),    # per-sample partials
    )

    cost = pl.CostEstimate(
        flops=int(4 * bpad * C * T + 2 * bpad * T * twp),
        transcendentals=int(bpad * T * (C + 1) + bpad),
        bytes_accessed=int(bpad * C * T * jnp.dtype(X.dtype).itemsize + bpad * 8 * 4),
    )

    partial = pl.pallas_call(
        _smp_kernel,
        out_shape=jax.ShapeDtypeStruct((bpad, 1), jnp.float32),
        grid_spec=grid_spec,
        compiler_params=pltpu.CompilerParams(
            dimension_semantics=("parallel",),      # batch blocks are independent
            vmem_limit_bytes=_vmem_limit_bytes()),  # <=~54 MiB on v7x, ~108 MiB v5e/v6e
        cost_estimate=cost,
    )(meta, onehot, band, Xt)
    return jnp.sum(partial)


def reference_loss_numpy(X, lengths, tgt, w_end,
                         win_size=WIN_SIZE, offset_d=OFFSET_D):
    """Pure numpy replica of the PyTorch forward, for verification."""
    X = np.asarray(X, np.float64)
    B, T, C = X.shape
    mask = np.arange(T)[None, :] >= np.asarray(lengths)[:, None]
    Xc = np.clip(np.where(mask[:, :, None], 0.0, X), 1e-8, 1.0)
    neg_mask = np.ones_like(Xc, dtype=bool)
    filt = _full_filter(win_size, TRUNC, SIGMA)

    valid_idx = [i for i in range(B) if int(tgt[i]) != -1]
    pos_loss = 0.0
    if valid_idx:
        starts, ends = [], []
        for i in valid_idx:
            neg_mask[i, :, int(tgt[i])] = False
            s = max(0, int(w_end[i]) + offset_d - win_size)
            e = min(s + win_size, int(lengths[i]))
            starts.append(s); ends.append(e)
        maxw = max(e - s for s, e in zip(starts, ends))
        pw = np.zeros((len(valid_idx), maxw))
        for k, i in enumerate(valid_idx):
            pw[k, :ends[k] - starts[k]] = Xc[i, starts[k]:ends[k], int(tgt[i])]
        left = SAME_LEFT_PAD
        padded = np.pad(pw, ((0, 0), (left, win_size - 1 - left)))
        sm = np.zeros((len(valid_idx), maxw))
        for p in range(maxw):
            sm[:, p] = padded[:, p:p + win_size] @ filt
        maxp = np.clip(sm.max(axis=1), 1e-8, 1.0)
        pos_loss = float((-np.log(maxp)).sum())
        for k, i in enumerate(valid_idx):
            prob = Xc[i, :, int(tgt[i])]
            pos_loss += float(-np.log(1 - prob[:starts[k]]).sum())
            pos_loss += float(-np.log(1 - prob[ends[k]:int(lengths[i])]).sum())
    neg_loss = float((-np.log(1 - Xc) * neg_mask).sum())
    return pos_loss + neg_loss


if __name__ == "__main__":
    key = jax.random.PRNGKey(0)
    B, T, C = 4, 128, 8
    # "input sigmoid" probabilities in a numerically safe range
    X = jax.random.uniform(key, (B, T, C), jnp.float32, minval=0.02, maxval=0.98)
    lengths = jnp.array([128, 100, 80, 128], jnp.int32)
    tgt = jnp.array([3, -1, 5, 2], jnp.int32)      # -1 means negative sample
    w_end = jnp.array([50, 1, 30, 90], jnp.int32)  # word-end frames

    loss = decoder_smp_loss(X, lengths, tgt, w_end)
    loss = jax.block_until_ready(loss)

    ref = reference_loss_numpy(np.asarray(X), np.asarray(lengths),
                               np.asarray(tgt), np.asarray(w_end))
    assert np.isfinite(float(loss))
    np.testing.assert_allclose(float(loss), float(ref), rtol=2e-3)
    print("KERNEL_OK")
</pallas_src>

<mosaic_0001>
module attributes {stable_mosaic.version = 11 : i64} {
  func.func @_smp_kernel(%arg0: i32, %arg1: memref<8x8xi32, #tpu.memory_space<vmem>>, %arg2: memref<8x8x1xf32, #tpu.memory_space<vmem>>, %arg3: memref<128x256xf32, #tpu.memory_space<vmem>>, %arg4: memref<8x8x128xf32, #tpu.memory_space<vmem>>, %arg5: memref<8x1xf32, #tpu.memory_space<vmem>>) attributes {dimension_semantics = [#tpu.dimension_semantics<parallel>], iteration_bounds = array<i64: 2>, scalar_prefetch = 0 : i64, scratch_operands = 0 : i64, tpu.core_type = #tpu.core_type<tc>, window_params = [{transform_indices = @transform_0, window_bounds = array<i64: 8, 8>}, {transform_indices = @transform_1, window_bounds = array<i64: 8, 8, 1>}, {pipeline_mode = #tpu.pipeline_mode<synchronous>, transform_indices = @transform_2, window_bounds = array<i64: 128, 256>}, {transform_indices = @transform_3, window_bounds = array<i64: 8, 8, 128>}, {transform_indices = @transform_4, window_bounds = array<i64: 8, 1>}]} {
    %c0 = arith.constant 0 : index
    %c0_0 = arith.constant 0 : index
    %0 = vector.load %arg1[%c0, %c0_0] : memref<8x8xi32, #tpu.memory_space<vmem>>, vector<8x8xi32>
    %1 = vector.extract_strided_slice %0 {offsets = [0, 0], sizes = [8, 1], strides = [1, 1]} : vector<8x8xi32> to vector<8x1xi32>
    %2 = vector.extract_strided_slice %0 {offsets = [0, 1], sizes = [8, 1], strides = [1, 1]} : vector<8x8xi32> to vector<8x1xi32>
    %3 = vector.extract_strided_slice %0 {offsets = [0, 2], sizes = [8, 1], strides = [1, 1]} : vector<8x8xi32> to vector<8x1xi32>
    %4 = vector.extract_strided_slice %0 {offsets = [0, 3], sizes = [8, 1], strides = [1, 1]} : vector<8x8xi32> to vector<8x1xi32>
    %5 = vector.extract_strided_slice %0 {offsets = [0, 4], sizes = [8, 1], strides = [1, 1]} : vector<8x8xi32> to vector<8x1xi32>
    %6 = arith.sitofp %5 : vector<8x1xi32> to vector<8x1xf32>
    %7 = vector.extract_strided_slice %0 {offsets = [0, 5], sizes = [8, 1], strides = [1, 1]} : vector<8x8xi32> to vector<8x1xi32>
    %8 = arith.sitofp %7 : vector<8x1xi32> to vector<8x1xf32>
    %c0_1 = arith.constant 0 : index
    %c0_2 = arith.constant 0 : index
    %c0_3 = arith.constant 0 : index
    %9 = vector.load %arg2[%c0_1, %c0_2, %c0_3] : memref<8x8x1xf32, #tpu.memory_space<vmem>>, vector<8x8x1xf32>
    %c0_4 = arith.constant 0 : index
    %c0_5 = arith.constant 0 : index
    %c0_6 = arith.constant 0 : index
    %10 = vector.load %arg4[%c0_4, %c0_5, %c0_6] : memref<8x8x128xf32, #tpu.memory_space<vmem>>, vector<8x8x128xf32>
    %cst = arith.constant 9.99999993E-9 : f32
    %cst_7 = arith.constant 1.000000e+00 : f32
    %11 = vector.broadcast %cst : f32 to vector<8x8x128xf32>
    %12 = arith.maximumf %11, %10 : vector<8x8x128xf32>
    %13 = vector.broadcast %cst_7 : f32 to vector<8x8x128xf32>
    %14 = arith.minimumf %13, %12 : vector<8x8x128xf32>
    %cst_8 = arith.constant 1.000000e+00 : f32
    %15 = vector.broadcast %cst_8 : f32 to vector<8x8x128xf32>
    %16 = arith.subf %15, %14 : vector<8x8x128xf32>
    %17 = math.log %16 : vector<8x8x128xf32>
    %cst_9 = arith.constant 0.000000e+00 : f32
    %18 = vector.broadcast %cst_9 : f32 to vector<8x8x128xf32>
    %19 = arith.subf %18, %17 : vector<8x8x128xf32>
    %cst_10 = arith.constant dense<0.000000e+00> : vector<8x128xf32>
    %20 = vector.multi_reduction <add>, %19, %cst_10 [1] : vector<8x8x128xf32> to vector<8x128xf32>
    %21 = tpu.iota {dimensions = array<i32: 1>} : vector<1x128xi32>
    %22 = vector.broadcast %21 : vector<1x128xi32> to vector<8x128xi32>
    %23 = vector.broadcast %1 : vector<8x1xi32> to vector<8x128xi32>
    %24 = arith.cmpi slt, %22, %23 : vector<8x128xi32>
    %cst_11 = arith.constant 0.000000e+00 : f32
    %25 = vector.broadcast %cst_11 : f32 to vector<8x128xf32>
    %26 = arith.select %24, %20, %25 : vector<8x128xi1>, vector<8x128xf32>
    %cst_12 = arith.constant dense<0.000000e+00> : vector<8xf32>
    %27 = vector.multi_reduction <add>, %26, %cst_12 [1] : vector<8x128xf32> to vector<8xf32>
    %28 = vector.shape_cast %27 : vector<8xf32> to vector<8x1xf32>
    %29 = vector.broadcast %9 : vector<8x8x1xf32> to vector<8x8x128xf32>
    %30 = arith.mulf %14, %29 : vector<8x8x128xf32>
    %cst_13 = arith.constant dense<0.000000e+00> : vector<8x128xf32>
    %31 = vector.multi_reduction <add>, %30, %cst_13 [1] : vector<8x8x128xf32> to vector<8x128xf32>
    %cst_14 = arith.constant 1.000000e+00 : f32
    %32 = vector.broadcast %cst_14 : f32 to vector<8x128xf32>
    %33 = arith.subf %32, %31 : vector<8x128xf32>
    %34 = math.log %33 : vector<8x128xf32>
    %cst_15 = arith.constant 0.000000e+00 : f32
    %35 = vector.broadcast %cst_15 : f32 to vector<8x128xf32>
    %36 = arith.subf %35, %34 : vector<8x128xf32>
    %37 = vector.broadcast %21 : vector<1x128xi32> to vector<8x128xi32>
    %38 = vector.broadcast %2 : vector<8x1xi32> to vector<8x128xi32>
    %39 = arith.cmpi sge, %37, %38 : vector<8x128xi32>
    %40 = vector.broadcast %21 : vector<1x128xi32> to vector<8x128xi32>
    %41 = vector.broadcast %3 : vector<8x1xi32> to vector<8x128xi32>
    %42 = arith.cmpi slt, %40, %41 : vector<8x128xi32>
    %43 = arith.andi %39, %42 : vector<8x128xi1>
    %cst_16 = arith.constant 0.000000e+00 : f32
    %44 = vector.broadcast %cst_16 : f32 to vector<8x128xf32>
    %45 = arith.select %43, %36, %44 : vector<8x128xi1>, vector<8x128xf32>
    %cst_17 = arith.constant dense<0.000000e+00> : vector<8xf32>
    %46 = vector.multi_reduction <add>, %45, %cst_17 [1] : vector<8x128xf32> to vector<8xf32>
    %47 = vector.shape_cast %46 : vector<8xf32> to vector<8x1xf32>
    %48 = arith.mulf %47, %6 : vector<8x1xf32>
    %cst_18 = arith.constant 0.000000e+00 : f32
    %49 = vector.broadcast %cst_18 : f32 to vector<8x128xf32>
    %50 = arith.select %43, %31, %49 : vector<8x128xi1>, vector<8x128xf32>
    %c0_19 = arith.constant 0 : index
    %c0_20 = arith.constant 0 : index
    %51 = vector.load %arg3[%c0_19, %c0_20] : memref<128x256xf32, #tpu.memory_space<vmem>>, vector<128x256xf32>
    %cst_21 = arith.constant dense<0.000000e+00> : vector<8x256xf32>
    %52 = tpu.matmul %50, %51, %cst_21 {dimension_numbers = #tpu.dot_dimension_numbers<[1], [0], [0], [1], [0, 0, 1, 1], [], []>} : vector<8x128xf32>, vector<128x256xf32>, vector<8x256xf32> -> vector<8x256xf32>
    %53 = tpu.iota {dimensions = array<i32: 1>} : vector<1x256xi32>
    %54 = vector.broadcast %53 : vector<1x256xi32> to vector<8x256xi32>
    %55 = vector.broadcast %2 : vector<8x1xi32> to vector<8x256xi32>
    %56 = arith.cmpi sge, %54, %55 : vector<8x256xi32>
    %57 = vector.broadcast %53 : vector<1x256xi32> to vector<8x256xi32>
    %58 = vector.broadcast %4 : vector<8x1xi32> to vector<8x256xi32>
    %59 = arith.cmpi slt, %57, %58 : vector<8x256xi32>
    %60 = arith.andi %56, %59 : vector<8x256xi1>
    %cst_22 = arith.constant 0.000000e+00 : f32
    %61 = vector.broadcast %cst_22 : f32 to vector<8x256xf32>
    %62 = arith.select %60, %52, %61 : vector<8x256xi1>, vector<8x256xf32>
    %cst_23 = arith.constant dense<0xFF800000> : vector<8xf32>
    %63 = vector.multi_reduction <maximumf>, %62, %cst_23 [1] : vector<8x256xf32> to vector<8xf32>
    %64 = vector.shape_cast %63 : vector<8xf32> to vector<8x1xf32>
    %cst_24 = arith.constant 9.99999993E-9 : f32
    %cst_25 = arith.constant 1.000000e+00 : f32
    %65 = vector.broadcast %cst_24 : f32 to vector<8x1xf32>
    %66 = arith.maximumf %65, %64 : vector<8x1xf32>
    %67 = vector.broadcast %cst_25 : f32 to vector<8x1xf32>
    %68 = arith.minimumf %67, %66 : vector<8x1xf32>
    %69 = math.log %68 : vector<8x1xf32>
    %cst_26 = arith.constant 0.000000e+00 : f32
    %70 = vector.broadcast %cst_26 : f32 to vector<8x1xf32>
    %71 = arith.subf %70, %69 : vector<8x1xf32>
    %72 = arith.mulf %71, %6 : vector<8x1xf32>
    %73 = arith.subf %28, %48 : vector<8x1xf32>
    %74 = arith.addf %73, %72 : vector<8x1xf32>
    %75 = arith.mulf %74, %8 : vector<8x1xf32>
    %c0_27 = arith.constant 0 : index
    %c0_28 = arith.constant 0 : index
    %76 = vector.load %arg5[%c0_27, %c0_28] : memref<8x1xf32, #tpu.memory_space<vmem>>, vector<8x1xf32>
    tpu.vector_store %arg5[%c0_27, %c0_28], %75 {strides = array<i32>} : memref<8x1xf32, #tpu.memory_space<vmem>>, vector<8x1xf32>,
    return
  }
  func.func @transform_0(%arg0: i32) -> (i32, i32) {
    %c0_i32 = arith.constant 0 : i32
    %c0_i32_0 = arith.constant 0 : i32
    return %arg0, %c0_i32 : i32, i32
  }
  func.func @transform_1(%arg0: i32) -> (i32, i32, i32) {
    %c0_i32 = arith.constant 0 : i32
    %c0_i32_0 = arith.constant 0 : i32
    %c0_i32_1 = arith.constant 0 : i32
    return %arg0, %c0_i32, %c0_i32_0 : i32, i32, i32
  }
  func.func @transform_2(%arg0: i32) -> (i32, i32) {
    %c0_i32 = arith.constant 0 : i32
    %c0_i32_0 = arith.constant 0 : i32
    %c0_i32_1 = arith.constant 0 : i32
    return %c0_i32, %c0_i32_0 : i32, i32
  }
  func.func @transform_3(%arg0: i32) -> (i32, i32, i32) {
    %c0_i32 = arith.constant 0 : i32
    %c0_i32_0 = arith.constant 0 : i32
    %c0_i32_1 = arith.constant 0 : i32
    return %arg0, %c0_i32, %c0_i32_0 : i32, i32, i32
  }
  func.func @transform_4(%arg0: i32) -> (i32, i32) {
    %c0_i32 = arith.constant 0 : i32
    %c0_i32_0 = arith.constant 0 : i32
    return %arg0, %c0_i32 : i32, i32
  }
}

</mosaic_0001>

<llo_original>
// kernel: tpu_custom_call.1
$region0: #{tpu_custom_call.1}
  #allocation0 [shape = 'u32[]', space=smem, size = 0x4, offset = 0x4, fixed_abs, tag = 'smem constant byte address 0x4 - core index']
  #allocation1 [shape = 'u32[144,128]{1,0:T(1,128)}', space=vmem, size = 0x12000, scoped, tag = 'internal scratch']
  %s0 = inlined_call_operand.vmem [shape: s32[16,8], index: 0, kind: input, shape index: {}]
  %s1 = inlined_call_operand.vmem [shape: f32[16,8,1], index: 1, kind: input, shape index: {}]
  %s2 = inlined_call_operand.hbm [shape: f32[128,256], index: 2, kind: input, shape index: {}]
  %s3 = inlined_call_operand.vmem [shape: f32[16,8,128], index: 3, kind: input, shape index: {}]
  %s4 = inlined_call_operand.vmem [shape: f32[16,1], index: 4, kind: output, shape index: {}]
  %s5 = sld [smem:[#allocation0]]
  $region53: #{tpu_custom_call.1} parent=0
    _
  %s7 = ssub.s32 1, %s5
  %s8 = scalar_select 0, %s7, %s5
  $region1: #{tpu_custom_call.1} parent=0
    #allocation2 [shape = 'u8[131072]{0}', space=vmem, size = 0x20000, scoped, tag = 'input window, operand 2, single buffered']
    #allocation3 [shape = 's32[2]{0}', space=sflag, size = 0x8, scoped, tag = 'scoped memory for tpu_custom_call.1']
    %9 = vsyncpa [#allocation3], 0
    loop: start=0, step=1, limit=4
    $region2: #{tpu_custom_call.1} parent=1 // loop_pre_header
      _
    $region3: #{tpu_custom_call.1} parent=1 // loop_header
      %s11 = sphi 0, %s15
      %p12 = scmp.ge.s32.totalorder %s11, 4
      %s21 = sphi 0, %s23
      %s24 = sphi 0, %s21
      %s25 = sphi 0, %s24
      %s41 = sphi 0, %s25
      %s47 = sphi 0, %s49
      %s50 = sphi 0, %s47
      %s51 = sphi 0, %s50
      %s67 = sphi 0, %s51
      %s71 = sphi 0, %s71
      %s73 = sphi 0, %s71
      %s74 = sphi 0, %s73
      %s88 = sphi 0, %s74
      %s94 = sphi 0, %s96
      %s97 = sphi 0, %s94
      %s98 = sphi 0, %s97
      %s114 = sphi 0, %s98
      %s120 = sphi 0, %s122
      %s123 = sphi 0, %s120
      %s124 = sphi 0, %s123
      %s140 = sphi 0, %s124
    $region4: #{tpu_custom_call.1} parent=1 // loop_header_branch
      %14 = sbr.rel (%p12) target = $region8
    $region5: #{tpu_custom_call.1} parent=1 // loop_body
      %s16 = ssub.s32 %s11, 1
      %s17 = ssub.s32 %s11, 2
      %s18 = sadd.s32 %s11, 1
      %s19 = ssub.s32 %s11, %s18
      %p20 = scmp.eq.s32.totalorder %s19, 0
      %s22 = sadd.s32 %s21, 1
      %s23 = scalar_select %p20, %s21, %s22
      %p26 = pneg %p20
      %p27 = scmp.eq.s32.totalorder %s11, 1
      %p28 = por %p26, %p27
      %p29 = scmp.ne.s32.totalorder %s21, %s24
      %p30 = scmp.eq.s32.totalorder %s11, 0
      %p31 = por %p29, %p30
      %p32 = scmp.ne.s32.totalorder %s21, %s24
      %p33 = scmp.eq.s32.totalorder %s16, 1
      %p34 = por %p32, %p33
      %p35 = scmp.ne.s32.totalorder %s24, %s25
      %p36 = scmp.eq.s32.totalorder %s16, 0
      %p37 = por %p35, %p36
      %p38 = scmp.ne.s32.totalorder %s24, %s25
      %p39 = scmp.eq.s32.totalorder %s17, 1
      %p40 = por %p38, %p39
      %p42 = scmp.ne.s32.totalorder %s25, %s41
      %p43 = scmp.eq.s32.totalorder %s17, 0
      %p44 = por %p42, %p43
      %s45 = ssub.s32 %s11, %s18
      %p46 = scmp.eq.s32.totalorder %s45, 0
      %s48 = sadd.s32 %s47, 1
      %s49 = scalar_select %p46, %s47, %s48
      %p52 = pneg %p46
      %p53 = scmp.eq.s32.totalorder %s11, 1
      %p54 = por %p52, %p53
      %p55 = scmp.ne.s32.totalorder %s47, %s50
      %p56 = scmp.eq.s32.totalorder %s11, 0
      %p57 = por %p55, %p56
      %p58 = scmp.ne.s32.totalorder %s47, %s50
      %p59 = scmp.eq.s32.totalorder %s16, 1
      %p60 = por %p58, %p59
      %p61 = scmp.ne.s32.totalorder %s50, %s51
      %p62 = scmp.eq.s32.totalorder %s16, 0
      %p63 = por %p61, %p62
      %p64 = scmp.ne.s32.totalorder %s50, %s51
      %p65 = scmp.eq.s32.totalorder %s17, 1
      %p66 = por %p64, %p65
      %p68 = scmp.ne.s32.totalorder %s51, %s67
      %p69 = scmp.eq.s32.totalorder %s17, 0
      %p70 = por %p68, %p69
      %s72 = sadd.s32 %s71, 1
      %p75 = scmp.eq.s32.totalorder %s11, 1
      %p76 = scmp.ne.s32.totalorder %s71, %s73
      %p77 = scmp.eq.s32.totalorder %s11, 0
      %p78 = por %p76, %p77
      %p79 = scmp.ne.s32.totalorder %s71, %s73
      %p80 = scmp.eq.s32.totalorder %s16, 1
      %p81 = por %p79, %p80
      %p82 = scmp.ne.s32.totalorder %s73, %s74
      %p83 = scmp.eq.s32.totalorder %s16, 0
      %p84 = por %p82, %p83
      %p85 = scmp.ne.s32.totalorder %s73, %s74
      %p86 = scmp.eq.s32.totalorder %s17, 1
      %p87 = por %p85, %p86
      %p89 = scmp.ne.s32.totalorder %s74, %s88
      %p90 = scmp.eq.s32.totalorder %s17, 0
      %p91 = por %p89, %p90
      %s92 = ssub.s32 %s11, %s18
      %p93 = scmp.eq.s32.totalorder %s92, 0
      %s95 = sadd.s32 %s94, 1
      %s96 = scalar_select %p93, %s94, %s95
      %p99 = pneg %p93
      %p100 = scmp.eq.s32.totalorder %s11, 1
      %p101 = por %p99, %p100
      %p102 = scmp.ne.s32.totalorder %s94, %s97
      %p103 = scmp.eq.s32.totalorder %s11, 0
      %p104 = por %p102, %p103
      %p105 = scmp.ne.s32.totalorder %s94, %s97
      %p106 = scmp.eq.s32.totalorder %s16, 1
      %p107 = por %p105, %p106
      %p108 = scmp.ne.s32.totalorder %s97, %s98
      %p109 = scmp.eq.s32.totalorder %s16, 0
      %p110 = por %p108, %p109
      %p111 = scmp.ne.s32.totalorder %s97, %s98
      %p112 = scmp.eq.s32.totalorder %s17, 1
      %p113 = por %p111, %p112
      %p115 = scmp.ne.s32.totalorder %s98, %s114
      %p116 = scmp.eq.s32.totalorder %s17, 0
      %p117 = por %p115, %p116
      %s118 = ssub.s32 %s11, %s18
      %p119 = scmp.eq.s32.totalorder %s118, 0
      %s121 = sadd.s32 %s120, 1
      %s122 = scalar_select %p119, %s120, %s121
      %p125 = pneg %p119
      %p126 = scmp.eq.s32.totalorder %s11, 1
      %p127 = por %p125, %p126
      %p128 = scmp.ne.s32.totalorder %s120, %s123
      %p129 = scmp.eq.s32.totalorder %s11, 0
      %p130 = por %p128, %p129
      %p131 = scmp.ne.s32.totalorder %s120, %s123
      %p132 = scmp.eq.s32.totalorder %s16, 1
      %p133 = por %p131, %p132
      %p134 = scmp.ne.s32.totalorder %s123, %s124
      %p135 = scmp.eq.s32.totalorder %s16, 0
      %p136 = por %p134, %p135
      %p137 = scmp.ne.s32.totalorder %s123, %s124
      %p138 = scmp.eq.s32.totalorder %s17, 1
      %p139 = por %p137, %p138
      %p141 = scmp.ne.s32.totalorder %s124, %s140
      %p142 = scmp.eq.s32.totalorder %s17, 0
      %p143 = por %p141, %p142
      %p144 = scmp.le.s32.totalorder 1, %s11
      %p145 = scmp.lt.s32.totalorder %s11, 3
      %p146 = pnand %p144, %p145
      %p147 = pneg %p146
      // Predicated region
      $region9: #{tpu_custom_call.1} parent=5 // pred_check
        _
      $region10: #{tpu_custom_call.1} parent=5 // pred_check_branch
        %149 = sbr.rel (%p146) target = $region12
      $region11: #{tpu_custom_call.1} parent=5 // pred_region
        %s150 = ssub.s32 %s11, 1
        // Predicated region
        $region13: #{tpu_custom_call.1} parent=11 // pred_check
          %p151 = pneg %p84
        $region14: #{tpu_custom_call.1} parent=11 // pred_check_branch
          %153 = sbr.rel (%p151) target = $region16
        $region15: #{tpu_custom_call.1} parent=11 // pred_region
          %s155 = ssub.s32 4096, 4096
          %156 = vsyncadd [#allocation3], %s155
          %s157 = sshll.u32 [#allocation2], 4
          %s158 = int_to_ptr.vmem [resolvable:$true] %s157
          %163 = dma.hbm_to_vmem [thread:$0]  %s2, 4096, %s158, [#allocation3], 256, 256, 16
        $region16: #{tpu_custom_call.1} parent=11 // pred_fallthru
          _
      $region12: #{tpu_custom_call.1} parent=5 // pred_fallthru
        _
      %p164 = scmp.lt.s32.totalorder %s11, 2
      // Predicated region
      $region17: #{tpu_custom_call.1} parent=5 // pred_check
        %p165 = pneg %p164
      $region18: #{tpu_custom_call.1} parent=5 // pred_check_branch
        %167 = sbr.rel (%p165) target = $region20
      $region19: #{tpu_custom_call.1} parent=5 // pred_region
        // Predicated region
        $region21: #{tpu_custom_call.1} parent=19 // pred_check
          %p168 = pneg %p31
        $region22: #{tpu_custom_call.1} parent=19 // pred_check_branch
          %170 = sbr.rel (%p168) target = $region24
        $region23: #{tpu_custom_call.1} parent=19 // pred_region
          %p171 = scmp.lt.s32.totalorder %s11, 1
          %s172 = scalar_select %p171, %s11, 1
          %s173 = smul.addr %s172, 8
          %s174 = scalar_lea.vmem %s0, %s173
        $region24: #{tpu_custom_call.1} parent=19 // pred_fallthru
          _
        // Predicated region
        $region25: #{tpu_custom_call.1} parent=19 // pred_check
          %p175 = pneg %p57
        $region26: #{tpu_custom_call.1} parent=19 // pred_check_branch
          %177 = sbr.rel (%p175) target = $region28
        $region27: #{tpu_custom_call.1} parent=19 // pred_region
          %s178 = smul.u32 8, %s11
          %p179 = scmp.lt.s32.totalorder %s178, 15
          %s180 = scalar_select %p179, %s178, 15
          %s181 = smul.addr %s180, 8
          %s182 = scalar_lea.vmem %s1, %s181
          %s183 = smul.u32 8, %s11
        $region28: #{tpu_custom_call.1} parent=19 // pred_fallthru
          _
        // Predicated region
        $region29: #{tpu_custom_call.1} parent=19 // pred_check
          %p184 = pneg %p104
        $region30: #{tpu_custom_call.1} parent=19 // pred_check_branch
          %186 = sbr.rel (%p184) target = $region32
        $region31: #{tpu_custom_call.1} parent=19 // pred_region
          %s187 = smul.u32 8, %s11
          %p188 = scmp.lt.s32.totalorder %s187, 15
          %s189 = scalar_select %p188, %s187, 15
          %s190 = smul.addr %s189, 8
          %s191 = scalar_lea.vmem %s3, %s190
          %s192 = smul.u32 8, %s11
        $region32: #{tpu_custom_call.1} parent=19 // pred_fallthru
          _
      $region20: #{tpu_custom_call.1} parent=5 // pred_fallthru
        _
      %p193 = scmp.le.s32.totalorder 1, %s11
      %p194 = scmp.lt.s32.totalorder %s11, 3
      %p195 = pnand %p193, %p194
      %p196 = pneg %p195
      // Predicated region
      $region33: #{tpu_custom_call.1} parent=5 // pred_check
        _
      $region34: #{tpu_custom_call.1} parent=5 // pred_check_branch
        %198 = sbr.rel (%p195) target = $region36
      $region35: #{tpu_custom_call.1} parent=5 // pred_region
        %s199 = ssub.s32 %s11, 1
        // Predicated region
        $region37: #{tpu_custom_call.1} parent=35 // pred_check
          %p200 = pneg %p84
        $region38: #{tpu_custom_call.1} parent=35 // pred_check_branch
          %202 = sbr.rel (%p200) target = $region40
        $region39: #{tpu_custom_call.1} parent=35 // pred_region
          %203 = dma.done [#allocation3], 4096
        $region40: #{tpu_custom_call.1} parent=35 // pred_fallthru
          _
        %p204 = scmp.lt.s32.totalorder %s16, 1
        %s205 = scalar_select %p204, %s16, 1
        %s206 = smul.addr %s205, 8
        %s207 = scalar_lea.vmem %s0, %s206
        %p208 = pneg %p37
        %p209 = pneg %p34
        %s210 = smul.u32 8, %s16
        %p211 = scmp.lt.s32.totalorder %s210, 15
        %s212 = scalar_select %p211, %s210, 15
        %s213 = smul.addr %s212, 8
        %s214 = scalar_lea.vmem %s1, %s213
        %p215 = pneg %p63
        %p216 = pneg %p60
        %p217 = pneg %p84
        %p218 = pneg %p81
        %s219 = smul.u32 8, %s16
        %p220 = scmp.lt.s32.totalorder %s219, 15
        %s221 = scalar_select %p220, %s219, 15
        %s222 = smul.addr %s221, 8
        %s223 = scalar_lea.vmem %s3, %s222
        %p224 = pneg %p110
        %p225 = pneg %p107
        %p226 = pneg %p136
        %p227 = pneg %p133
        %p228 = scmp.lt.s32.totalorder %s16, 1
        %s229 = scalar_select %p228, %s16, 1
        %s230 = smul.addr %s229, 8
        %s231 = scalar_lea.vmem %s4, %s230
        %p232 = scmp.lt.s32.totalorder %s16, 1
        %s233 = scalar_select %p232, %s16, 1
        %s234 = smul.addr %s233, 8
        %s235 = scalar_lea.vmem %s0, %s234
        %s236 = smul.u32 8, %s16
        %p237 = scmp.lt.s32.totalorder %s236, 15
        %s238 = scalar_select %p237, %s236, 15
        %s239 = smul.addr %s238, 8
        %s240 = scalar_lea.vmem %s1, %s239
        %s241 = smul.u32 8, %s16
        %s242 = smul.u32 8, %s16
        %p243 = scmp.lt.s32.totalorder %s242, 15
        %s244 = scalar_select %p243, %s242, 15
        %s245 = smul.addr %s244, 8
        %s246 = scalar_lea.vmem %s3, %s245
        %s247 = smul.u32 8, %s16
        %p248 = scmp.lt.s32.totalorder %s16, 1
        %s249 = scalar_select %p248, %s16, 1
        %s250 = smul.addr %s249, 8
        %s251 = scalar_lea.vmem %s4, %s250
        %v252 = vld [vmem:[%s235] sm:$0xff]
        %v253 = vcvt.s32.f32 %v252
        %v254 = vld [vmem:[%s240] sm:$0xff]
        %v255 = vld [vmem:[%s240 + $0x8] sm:$0xff]
        %v256 = vld [vmem:[%s240 + $0x10] sm:$0xff]
        %v257 = vld [vmem:[%s240 + $0x18] sm:$0xff]
        %v258 = vld [vmem:[%s240 + $0x20] sm:$0xff]
        %v259 = vld [vmem:[%s240 + $0x28] sm:$0xff]
        %v260 = vld [vmem:[%s240 + $0x30] sm:$0xff]
        %v261 = vld [vmem:[%s240 + $0x38] sm:$0xff]
        %v262 = vld [vmem:[%s246] sm:$0xff]
        %v263 = vld [vmem:[%s246 + $0x8] sm:$0xff]
        %v264 = vld [vmem:[%s246 + $0x10] sm:$0xff]
        %v265 = vld [vmem:[%s246 + $0x18] sm:$0xff]
        %v266 = vld [vmem:[%s246 + $0x20] sm:$0xff]
        %v267 = vld [vmem:[%s246 + $0x28] sm:$0xff]
        %v268 = vld [vmem:[%s246 + $0x30] sm:$0xff]
        %v269 = vld [vmem:[%s246 + $0x38] sm:$0xff]
        %v270 = vmax.f32 %v262, 1e-08
        %v271 = vmax.f32 %v263, 1e-08
        %v272 = vmax.f32 %v264, 1e-08
        %v273 = vmax.f32 %v265, 1e-08
        %v274 = vmax.f32 %v266, 1e-08
        %v275 = vmax.f32 %v267, 1e-08
        %v276 = vmax.f32 %v268, 1e-08
        %v277 = vmax.f32 %v269, 1e-08
        %v278 = vmin.f32 %v270, 1.0
        %v279 = vmin.f32 %v271, 1.0
        %v280 = vmin.f32 %v272, 1.0
        %v281 = vmin.f32 %v273, 1.0
        %v282 = vmin.f32 %v274, 1.0
        %v283 = vmin.f32 %v275, 1.0
        %v284 = vmin.f32 %v276, 1.0
        %v285 = vmin.f32 %v277, 1.0
        %v286 = vsub.f32 1.0, %v278
        %v287 = vsub.f32 1.0, %v279
        %v288 = vsub.f32 1.0, %v280
        %v289 = vsub.f32 1.0, %v281
        %v290 = vsub.f32 1.0, %v282
        %v291 = vsub.f32 1.0, %v283
        %v292 = vsub.f32 1.0, %v284
        %v293 = vsub.f32 1.0, %v285
        %v294 = vlog2.pop %v286
        %v295 = vmul.f32 %v294, 0.6931472
        %v296 = vlog2.pop %v287
        %v297 = vmul.f32 %v296, 0.6931472
        %v298 = vlog2.pop %v288
        %v299 = vmul.f32 %v298, 0.6931472
        %v300 = vlog2.pop %v289
        %v301 = vmul.f32 %v300, 0.6931472
        %v302 = vlog2.pop %v290
        %v303 = vmul.f32 %v302, 0.6931472
        %v304 = vlog2.pop %v291
        %v305 = vmul.f32 %v304, 0.6931472
        %v306 = vlog2.pop %v292
        %v307 = vmul.f32 %v306, 0.6931472
        %v308 = vlog2.pop %v293
        %v309 = vmul.f32 %v308, 0.6931472
        %v310 = vsub.f32 0.0, %v295
        %v311 = vsub.f32 0.0, %v297
        %v312 = vsub.f32 0.0, %v299
        %v313 = vsub.f32 0.0, %v301
        %v314 = vsub.f32 0.0, %v303
        %v315 = vsub.f32 0.0, %v305
        %v316 = vsub.f32 0.0, %v307
        %v317 = vsub.f32 0.0, %v309
        %v318 = vrot.slane %v310, 4
        %v319 = vadd.f32 %v310, %v318
        %v320 = vrot.slane %v319, 2
        %v321 = vadd.f32 %v319, %v320
        %v322 = vrot.slane %v321, 1
        %v323 = vadd.f32 %v321, %v322
        %v324 = vrot.slane %v311, 4
        %v325 = vadd.f32 %v311, %v324
        %v326 = vrot.slane %v325, 2
        %v327 = vadd.f32 %v325, %v326
        %v328 = vrot.slane %v327, 1
        %v329 = vadd.f32 %v327, %v328
        %v330 = vrot.slane %v312, 4
        %v331 = vadd.f32 %v312, %v330
        %v332 = vrot.slane %v331, 2
        %v333 = vadd.f32 %v331, %v332
        %v334 = vrot.slane %v333, 1
        %v335 = vadd.f32 %v333, %v334
        %v336 = vrot.slane %v313, 4
        %v337 = vadd.f32 %v313, %v336
        %v338 = vrot.slane %v337, 2
        %v339 = vadd.f32 %v337, %v338
        %v340 = vrot.slane %v339, 1
        %v341 = vadd.f32 %v339, %v340
        %v342 = vrot.slane %v314, 4
        %v343 = vadd.f32 %v314, %v342
        %v344 = vrot.slane %v343, 2
        %v345 = vadd.f32 %v343, %v344
        %v346 = vrot.slane %v345, 1
        %v347 = vadd.f32 %v345, %v346
        %v348 = vrot.slane %v315, 4
        %v349 = vadd.f32 %v315, %v348
        %v350 = vrot.slane %v349, 2
        %v351 = vadd.f32 %v349, %v350
        %v352 = vrot.slane %v351, 1
        %v353 = vadd.f32 %v351, %v352
        %v354 = vrot.slane %v316, 4
        %v355 = vadd.f32 %v316, %v354
        %v356 = vrot.slane %v355, 2
        %v357 = vadd.f32 %v355, %v356
        %v358 = vrot.slane %v357, 1
        %v359 = vadd.f32 %v357, %v358
        %v360 = vrot.slane %v317, 4
        %v361 = vadd.f32 %v317, %v360
        %v362 = vrot.slane %v361, 2
        %v363 = vadd.f32 %v361, %v362
        %v364 = vrot.slane %v363, 1
        %v365 = vadd.f32 %v363, %v364
        %v366 = vlaneseq
        %v367 = vand.u32 %v366, 127
        %368 = vset.pattern.permute.xlu0 0
        %369 = vperm.xlu0 %368, %v252
        %v370 = vpop.permute.xlu0 %369
        %vm371 = vcmp.lt.s32.totalorder %v367, %v370
        %vm380 = vcmask 1041409
        %v381 = vsel %vm380, %v329, %v323
        %vm382 = vcmask 1042434
        %v383 = vsel %vm382, %v335, %v381
        %vm384 = vcmask 1043459
        %v385 = vsel %vm384, %v341, %v383
        %vm386 = vcmask 1044484
        %v387 = vsel %vm386, %v347, %v385
        %vm388 = vcmask 1045509
        %v389 = vsel %vm388, %v353, %v387
        %vm390 = vcmask 1046534
        %v391 = vsel %vm390, %v359, %v389
        %vm392 = vcmask 1047559
        %v393 = vsel %vm392, %v365, %v391
        %v395 = vsel %vm371, %v393, 0.0
        %396 = vadd.xlane.f32.xlu0 %v395
        %v397 = vpop.xlane.xlu0 %396
        %399 = vset.pattern.permute.xlu0 0
        %400 = vperm.xlu0 %399, %v254
        %v401 = vpop.permute.xlu0 %400
        %404 = vset.pattern.permute.xlu0 0
        %405 = vperm.xlu0 %404, %v255
        %v406 = vpop.permute.xlu0 %405
        %409 = vset.pattern.permute.xlu0 0
        %410 = vperm.xlu0 %409, %v256
        %v411 = vpop.permute.xlu0 %410
        %414 = vset.pattern.permute.xlu0 0
        %415 = vperm.xlu0 %414, %v257
        %v416 = vpop.permute.xlu0 %415
        %419 = vset.pattern.permute.xlu0 0
        %420 = vperm.xlu0 %419, %v258
        %v421 = vpop.permute.xlu0 %420
        %424 = vset.pattern.permute.xlu0 0
        %425 = vperm.xlu0 %424, %v259
        %v426 = vpop.permute.xlu0 %425
        %429 = vset.pattern.permute.xlu0 0
        %430 = vperm.xlu0 %429, %v260
        %v431 = vpop.permute.xlu0 %430
        %434 = vset.pattern.permute.xlu0 0
        %435 = vperm.xlu0 %434, %v261
        %v436 = vpop.permute.xlu0 %435
        %v438 = vmul.f32 %v278, %v401
        %v439 = vmul.f32 %v279, %v406
        %v440 = vmul.f32 %v280, %v411
        %v441 = vmul.f32 %v281, %v416
        %v442 = vmul.f32 %v282, %v421
        %v443 = vmul.f32 %v283, %v426
        %v444 = vmul.f32 %v284, %v431
        %v445 = vmul.f32 %v285, %v436
        %v446 = vrot.slane %v438, 4
        %v447 = vadd.f32 %v438, %v446
        %v448 = vrot.slane %v447, 2
        %v449 = vadd.f32 %v447, %v448
        %v450 = vrot.slane %v449, 1
        %v451 = vadd.f32 %v449, %v450
        %v452 = vrot.slane %v439, 4
        %v453 = vadd.f32 %v439, %v452
        %v454 = vrot.slane %v453, 2
        %v455 = vadd.f32 %v453, %v454
        %v456 = vrot.slane %v455, 1
        %v457 = vadd.f32 %v455, %v456
        %v458 = vrot.slane %v440, 4
        %v459 = vadd.f32 %v440, %v458
        %v460 = vrot.slane %v459, 2
        %v461 = vadd.f32 %v459, %v460
        %v462 = vrot.slane %v461, 1
        %v463 = vadd.f32 %v461, %v462
        %v464 = vrot.slane %v441, 4
        %v465 = vadd.f32 %v441, %v464
        %v466 = vrot.slane %v465, 2
        %v467 = vadd.f32 %v465, %v466
        %v468 = vrot.slane %v467, 1
        %v469 = vadd.f32 %v467, %v468
        %v470 = vrot.slane %v442, 4
        %v471 = vadd.f32 %v442, %v470
        %v472 = vrot.slane %v471, 2
        %v473 = vadd.f32 %v471, %v472
        %v474 = vrot.slane %v473, 1
        %v475 = vadd.f32 %v473, %v474
        %v476 = vrot.slane %v443, 4
        %v477 = vadd.f32 %v443, %v476
        %v478 = vrot.slane %v477, 2
        %v479 = vadd.f32 %v477, %v478
        %v480 = vrot.slane %v479, 1
        %v481 = vadd.f32 %v479, %v480
        %v482 = vrot.slane %v444, 4
        %v483 = vadd.f32 %v444, %v482
        %v484 = vrot.slane %v483, 2
        %v485 = vadd.f32 %v483, %v484
        %v486 = vrot.slane %v485, 1
        %v487 = vadd.f32 %v485, %v486
        %v488 = vrot.slane %v445, 4
        %v489 = vadd.f32 %v445, %v488
        %v490 = vrot.slane %v489, 2
        %v491 = vadd.f32 %v489, %v490
        %v492 = vrot.slane %v491, 1
        %v493 = vadd.f32 %v491, %v492
        %v494 = vsub.f32 1.0, %v451
        %v495 = vsub.f32 1.0, %v457
        %v496 = vsub.f32 1.0, %v463
        %v497 = vsub.f32 1.0, %v469
        %v498 = vsub.f32 1.0, %v475
        %v499 = vsub.f32 1.0, %v481
        %v500 = vsub.f32 1.0, %v487
        %v501 = vsub.f32 1.0, %v493
        %v502 = vlog2.pop %v494
        %v503 = vmul.f32 %v502, 0.6931472
        %v504 = vlog2.pop %v495
        %v505 = vmul.f32 %v504, 0.6931472
        %v506 = vlog2.pop %v496
        %v507 = vmul.f32 %v506, 0.6931472
        %v508 = vlog2.pop %v497
        %v509 = vmul.f32 %v508, 0.6931472
        %v510 = vlog2.pop %v498
        %v511 = vmul.f32 %v510, 0.6931472
        %v512 = vlog2.pop %v499
        %v513 = vmul.f32 %v512, 0.6931472
        %v514 = vlog2.pop %v500
        %v515 = vmul.f32 %v514, 0.6931472
        %v516 = vlog2.pop %v501
        %v517 = vmul.f32 %v516, 0.6931472
        %v518 = vsub.f32 0.0, %v503
        %v519 = vsub.f32 0.0, %v505
        %v520 = vsub.f32 0.0, %v507
        %v521 = vsub.f32 0.0, %v509
        %v522 = vsub.f32 0.0, %v511
        %v523 = vsub.f32 0.0, %v513
        %v524 = vsub.f32 0.0, %v515
        %v525 = vsub.f32 0.0, %v517
        %526 = vset.pattern.permute.xlu0 1
        %527 = vperm.xlu0 %526, %v252
        %v528 = vpop.permute.xlu0 %527
        %vm529 = vcmp.ge.s32.totalorder %v367, %v528
        %530 = vset.pattern.permute.xlu0 2
        %531 = vperm.xlu0 %530, %v252
        %v532 = vpop.permute.xlu0 %531
        %vm533 = vcmp.lt.s32.totalorder %v367, %v532
        %vm534 = vmand %vm529, %vm533
        %v543 = vsel %vm380, %v519, %v518
        %v544 = vsel %vm382, %v520, %v543
        %v545 = vsel %vm384, %v521, %v544
        %v546 = vsel %vm386, %v522, %v545
        %v547 = vsel %vm388, %v523, %v546
        %v548 = vsel %vm390, %v524, %v547
        %v549 = vsel %vm392, %v525, %v548
        %v551 = vsel %vm534, %v549, 0.0
        %552 = vadd.xlane.f32.xlu0 %v551
        %v553 = vpop.xlane.xlu0 %552
        %v554 = vmul.f32 %v553, %v253
        %v563 = vsel %vm380, %v457, %v451
        %v564 = vsel %vm382, %v463, %v563
        %v565 = vsel %vm384, %v469, %v564
        %v566 = vsel %vm386, %v475, %v565
        %v567 = vsel %vm388, %v481, %v566
        %v568 = vsel %vm390, %v487, %v567
        %v569 = vsel %vm392, %v493, %v568
        %v571 = vsel %vm534, %v569, 0.0
        %v572 = vld [vmem:[#allocation2] sm:$0xff]
        %v573 = vld [vmem:[#allocation2 + $0x8] sm:$0xff]
        %v574 = vld [vmem:[#allocation2 + $0x10] sm:$0xff]
        %v575 = vld [vmem:[#allocation2 + $0x18] sm:$0xff]
        %v576 = vld [vmem:[#allocation2 + $0x20] sm:$0xff]
        %v577 = vld [vmem:[#allocation2 + $0x28] sm:$0xff]
        %v578 = vld [vmem:[#allocation2 + $0x30] sm:$0xff]
        %v579 = vld [vmem:[#allocation2 + $0x38] sm:$0xff]
        %v580 = vld [vmem:[#allocation2 + $0x40] sm:$0xff]
        %v581 = vld [vmem:[#allocation2 + $0x48] sm:$0xff]
        %v582 = vld [vmem:[#allocation2 + $0x50] sm:$0xff]
        %v583 = vld [vmem:[#allocation2 + $0x58] sm:$0xff]
        %v584 = vld [vmem:[#allocation2 + $0x60] sm:$0xff]
        %v585 = vld [vmem:[#allocation2 + $0x68] sm:$0xff]
        %v586 = vld [vmem:[#allocation2 + $0x70] sm:$0xff]
        %v587 = vld [vmem:[#allocation2 + $0x78] sm:$0xff]
        %v588 = vld [vmem:[#allocation2 + $0x80] sm:$0xff]
        %v589 = vld [vmem:[#allocation2 + $0x88] sm:$0xff]
        %v590 = vld [vmem:[#allocation2 + $0x90] sm:$0xff]
        %v591 = vld [vmem:[#allocation2 + $0x98] sm:$0xff]
        %v592 = vld [vmem:[#allocation2 + $0xa0] sm:$0xff]
        %v593 = vld [vmem:[#allocation2 + $0xa8] sm:$0xff]
        %v594 = vld [vmem:[#allocation2 + $0xb0] sm:$0xff]
        %v595 = vld [vmem:[#allocation2 + $0xb8] sm:$0xff]
        %v596 = vld [vmem:[#allocation2 + $0xc0] sm:$0xff]
        %v597 = vld [vmem:[#allocation2 + $0xc8] sm:$0xff]
        %v598 = vld [vmem:[#allocation2 + $0xd0] sm:$0xff]
        %v599 = vld [vmem:[#allocation2 + $0xd8] sm:$0xff]
        %v600 = vld [vmem:[#allocation2 + $0xe0] sm:$0xff]
        %v601 = vld [vmem:[#allocation2 + $0xe8] sm:$0xff]
        %v602 = vld [vmem:[#allocation2 + $0xf0] sm:$0xff]
        %v603 = vld [vmem:[#allocation2 + $0xf8] sm:$0xff]
        %604 = vmatprep.subr.mxu0 %v573
        %605 = vmatpush1.msra.mxu0 %v572
        %606 = vmatprep.subr.mxu0 %v575
        %607 = vmatpush1.msra.mxu0 %v574
        %608 = vmatprep.subr.mxu0 %v577
        %609 = vmatpush1.msra.mxu0 %v576
        %610 = vmatprep.subr.mxu0 %v579
        %611 = vmatpush1.msra.mxu0 %v578
        %612 = vmatprep.subr.mxu0 %v581
        %613 = vmatpush1.msra.mxu0 %v580
        %614 = vmatprep.subr.mxu0 %v583
        %615 = vmatpush1.msra.mxu0 %v582
        %616 = vmatprep.subr.mxu0 %v585
        %617 = vmatpush1.msra.mxu0 %v584
        %618 = vmatprep.subr.mxu0 %v587
        %619 = vmatpush1.msra.mxu0 %v586
        %620 = vmatprep.subr.mxu0 %v589
        %621 = vmatpush1.msra.mxu0 %v588
        %622 = vmatprep.subr.mxu0 %v591
        %623 = vmatpush1.msra.mxu0 %v590
        %624 = vmatprep.subr.mxu0 %v593
        %625 = vmatpush1.msra.mxu0 %v592
        %626 = vmatprep.subr.mxu0 %v595
        %627 = vmatpush1.msra.mxu0 %v594
        %628 = vmatprep.subr.mxu0 %v597
        %629 = vmatpush1.msra.mxu0 %v596
        %630 = vmatprep.subr.mxu0 %v599
        %631 = vmatpush1.msra.mxu0 %v598
        %632 = vmatprep.subr.mxu0 %v601
        %633 = vmatpush1.msra.mxu0 %v600
        %634 = vmatprep.subr.mxu0 %v603
        %635 = vmatpush1.msra.mxu0 %v602
        %636 = vmatprep.subr.mxu0 0.0
        %637 = vmatpush1.msra.mxu0 0.0
        %638 = vmatprep.subr.mxu0 0.0
        %639 = vmatpush1.msra.mxu0 0.0
        %640 = vmatprep.subr.mxu0 0.0
        %641 = vmatpush1.msra.mxu0 0.0
        %642 = vmatprep.subr.mxu0 0.0
        %643 = vmatpush1.msra.mxu0 0.0
        %644 = vmatprep.subr.mxu0 0.0
        %645 = vmatpush1.msra.mxu0 0.0
        %646 = vmatprep.subr.mxu0 0.0
        %647 = vmatpush1.msra.mxu0 0.0
        %648 = vmatprep.subr.mxu0 0.0
        %649 = vmatpush1.msra.mxu0 0.0
        %650 = vmatprep.subr.mxu0 0.0
        %651 = vmatpush1.msra.mxu0 0.0
        %652 = vmatprep.subr.mxu0 0.0
        %653 = vmatpush1.msra.mxu0 0.0
        %654 = vmatprep.subr.mxu0 0.0
        %655 = vmatpush1.msra.mxu0 0.0
        %656 = vmatprep.subr.mxu0 0.0
        %657 = vmatpush1.msra.mxu0 0.0
        %658 = vmatprep.subr.mxu0 0.0
        %659 = vmatpush1.msra.mxu0 0.0
        %660 = vmatprep.subr.mxu0 0.0
        %661 = vmatpush1.msra.mxu0 0.0
        %662 = vmatprep.subr.mxu0 0.0
        %663 = vmatpush1.msra.mxu0 0.0
        %664 = vmatprep.subr.mxu0 0.0
        %665 = vmatpush1.msra.mxu0 0.0
        %666 = vmatprep.subr.mxu0 0.0
        %667 = vmatpush1.msra.mxu0 0.0
        %668 = vmatprep.mubr.f32.mxu0 0.0
        %669 = vmatmul.mubr.f32.gmra.mrb[0].mxu0 %v571
        %v670 = vpop.f32.mrb[0].mxu0
        %v671 = vadd.f32 0.0, %v670
        %v672 = vpop.f32.mrb[0].mxu0
        %v673 = vadd.f32 0.0, %v672
        %674 = vdwg.mxu0
        %v675 = vadd.s32 %v367, 128
        %vm676 = vcmp.ge.s32.totalorder %v675, %v528
        %677 = vset.pattern.permute.xlu0 3
        %678 = vperm.xlu0 %677, %v252
        %v679 = vpop.permute.xlu0 %678
        %vm680 = vcmp.lt.s32.totalorder %v367, %v679
        %vm681 = vcmp.lt.s32.totalorder %v675, %v679
        %vm682 = vmand %vm529, %vm680
        %vm683 = vmand %vm676, %vm681
        %v684 = vsel %vm682, %v671, 0.0
        %v685 = vsel %vm683, %v673, 0.0
        %v686 = vmax.f32 %v684, %v685
        %687 = vmax.xlane.f32.xlu0 %v686
        %v688 = vpop.xlane.xlu0 %687
        %v689 = vmax.f32 %v688, 1e-08
        %v690 = vmin.f32 %v689, 1.0
        %v691 = vlog2.pop %v690
        %v692 = vmul.f32 %v691, 0.6931472
        %v693 = vsub.f32 0.0, %v692
        %v694 = vmul.f32 %v693, %v253
        %v695 = vsub.f32 %v397, %v554
        %v696 = vadd.f32 %v695, %v694
        %698 = vrot.lane.b32.xlu0 %v253, 127
        %v699 = vpop.permute.xlu0 %698
        %v701 = vmul.f32 %v696, %v699
        %703 = vrot.lane.b32.xlu0 %v701, 124
        %v704 = vpop.permute.xlu0 %703
        %vm706 = vcmask 7168
        %707 = vst.msk [vmem:[%s251] sm:$0xff] %vm706, %v704
        %p708 = scmp.lt.s32.totalorder %s16, 1
        %s709 = scalar_select %p708, %s16, 1
        %s710 = smul.addr %s709, 8
        %s711 = scalar_lea.vmem %s4, %s710
        // Predicated region
        $region41: #{tpu_custom_call.1} parent=35 // pred_check
          %p712 = pneg %p133
        $region42: #{tpu_custom_call.1} parent=35 // pred_check_branch
          %714 = sbr.rel (%p712) target = $region44
        $region43: #{tpu_custom_call.1} parent=35 // pred_region
          _
        $region44: #{tpu_custom_call.1} parent=35 // pred_fallthru
          _
      $region36: #{tpu_custom_call.1} parent=5 // pred_fallthru
        _
      %p715 = scmp.le.s32.totalorder 2, %s11
      // Predicated region
      $region45: #{tpu_custom_call.1} parent=5 // pred_check
        %p716 = pneg %p715
      $region46: #{tpu_custom_call.1} parent=5 // pred_check_branch
        %718 = sbr.rel (%p716) target = $region48
      $region47: #{tpu_custom_call.1} parent=5 // pred_region
        %s719 = ssub.s32 %s11, 2
        // Predicated region
        $region49: #{tpu_custom_call.1} parent=47 // pred_check
          %p720 = pneg %p139
        $region50: #{tpu_custom_call.1} parent=47 // pred_check_branch
          %722 = sbr.rel (%p720) target = $region52
        $region51: #{tpu_custom_call.1} parent=47 // pred_region
          %p723 = scmp.lt.s32.totalorder %s17, 1
          %s724 = scalar_select %p723, %s17, 1
          %s725 = smul.addr %s724, 8
          %s726 = scalar_lea.vmem %s4, %s725
        $region52: #{tpu_custom_call.1} parent=47 // pred_fallthru
          _
      $region48: #{tpu_custom_call.1} parent=5 // pred_fallthru
        _
    $region6: #{tpu_custom_call.1} parent=1 // loop_footer
      %s15 = sadd.s32 1, %s11
    $region7: #{tpu_custom_call.1} parent=1 // loop_footer_branch
      %10 = sbr.rel target = $region3
    $region8: #{tpu_custom_call.1} parent=1 // loop_exit
      _
    %727 = vsyncpa [#allocation3], 1
    %s728 = scalar_lea.sflag [#allocation3], 1
    %729 = vsyncpa %s728, 1

</llo_original>
